<compile_context>
chip_gen: v7x
topology: tpu7x:2x2x1
jax: 0.10.0
libtpu: 0.0.40
codegen_flags: <defaults>
</compile_context>

<pallas_src>
import math
from functools import partial

import jax
import jax.numpy as jnp
from jax.experimental import pallas as pl
from jax.experimental.pallas import tpu as pltpu


# ----------------------------------------------------------------------------
# Helpers.
# ----------------------------------------------------------------------------
def _round_up(x, m):
    return (x + m - 1) // m * m


def _pick_tile(n_pad, target):
    """Largest multiple of 128 that divides n_pad and is <= target."""
    t = max(128, (min(target, n_pad) // 128) * 128)
    while n_pad % t != 0:
        t -= 128
    return t


# ----------------------------------------------------------------------------
# Pallas kernel: one (tm, D) row tile of  out = A @ cur, reduced over K tiles.
# ----------------------------------------------------------------------------
def _spmm_kernel(adj_ref, cur_ref, out_ref):
    # Output block index is constant along the K (reduction) axis, so the
    # f32 output tile stays resident in VMEM and acts as the accumulator.
    @pl.when(pl.program_id(1) == 0)
    def _():
        out_ref[...] = jnp.zeros_like(out_ref)

    out_ref[...] += jnp.dot(adj_ref[...], cur_ref[...],
                            preferred_element_type=jnp.float32)


def _make_spmm(n_pad, d_pad, tm, tk):
    cost = pl.CostEstimate(
        flops=2 * n_pad * n_pad * d_pad,
        transcendentals=0,
        bytes_accessed=(n_pad * n_pad * 2        # bf16 adjacency
                        + n_pad * d_pad * 2      # bf16 current embeddings
                        + n_pad * d_pad * 4),    # f32 output
    )
    return pl.pallas_call(
        _spmm_kernel,
        out_shape=jax.ShapeDtypeStruct((n_pad, d_pad), jnp.float32),
        grid_spec=pltpu.PrefetchScalarGridSpec(
            num_scalar_prefetch=0,
            grid=(n_pad // tm, n_pad // tk),
            in_specs=[
                pl.BlockSpec((tm, tk), lambda m, k: (m, k)),      # A tile
                pl.BlockSpec((tk, d_pad), lambda m, k: (k, 0)),   # cur tile
            ],
            out_specs=pl.BlockSpec((tm, d_pad), lambda m, k: (m, 0)),
        ),
        compiler_params=pltpu.CompilerParams(
            dimension_semantics=("parallel", "arbitrary"),
        ),
        cost_estimate=cost,
    )


# ----------------------------------------------------------------------------
# Forward pass (LightGCN propagation + layer mean).
# ----------------------------------------------------------------------------
@partial(jax.jit, static_argnames=("n_layers",))
def lgcn_encoder_forward(norm_adj, user_emb, item_emb, n_layers):
    """Runs the LightGCN propagation; returns (user_all_emb, item_all_emb)."""
    user_num = user_emb.shape[0]
    ego = jnp.concatenate([user_emb, item_emb], axis=0).astype(jnp.float32)
    n_nodes, emb_size = ego.shape
    assert norm_adj.shape == (n_nodes, n_nodes)

    n_pad = _round_up(n_nodes, 128)
    d_pad = _round_up(emb_size, 128)      # lane-dense stores / full MXU cols
    tm = _pick_tile(n_pad, 256)           # destination-row tile ("parallel")
    tk = _pick_tile(n_pad, 512)           # contraction tile ("arbitrary")

    adj_bf16 = jnp.zeros((n_pad, n_pad), jnp.bfloat16)
    adj_bf16 = adj_bf16.at[:n_nodes, :n_nodes].set(norm_adj.astype(jnp.bfloat16))
    ego_p = jnp.zeros((n_pad, d_pad), jnp.float32)
    ego_p = ego_p.at[:n_nodes, :emb_size].set(ego)

    spmm = _make_spmm(n_pad, d_pad, tm, tk)

    cur = ego_p                            # e_0 (f32)
    acc = ego_p                            # running sum of e_0..e_k (f32)
    for _ in range(n_layers):
        cur = spmm(adj_bf16, cur.astype(jnp.bfloat16))   # e_{k+1} = A @ e_k
        acc = acc + cur
    out = (acc * (1.0 / (n_layers + 1)))[:n_nodes, :emb_size]
    return out[:user_num], out[user_num:]


# ----------------------------------------------------------------------------
# Deterministic parameter / graph construction (plain JAX glue).
# ----------------------------------------------------------------------------
def xavier_uniform(key, shape):
    fan_in, fan_out = shape[0], shape[1]
    bound = math.sqrt(6.0 / (fan_in + fan_out))
    return jax.random.uniform(key, shape, jnp.float32, -bound, bound)


def build_norm_adj(key, user_num, item_num, density=0.1):
    """Dense symmetric-normalized bipartite adjacency D^-1/2 A D^-1/2."""
    n = user_num + item_num
    r = (jax.random.uniform(key, (user_num, item_num)) < density).astype(
        jnp.float32)
    adj = jnp.zeros((n, n), jnp.float32)
    adj = adj.at[:user_num, user_num:].set(r)
    adj = adj.at[user_num:, :user_num].set(r.T)
    deg = jnp.clip(adj.sum(axis=1), 1.0, None)
    d_inv_sqrt = 1.0 / jnp.sqrt(deg)
    return adj * d_inv_sqrt[:, None] * d_inv_sqrt[None, :]


# ----------------------------------------------------------------------------
# References for sanity checks.
# ----------------------------------------------------------------------------
def lgcn_reference_f32(norm_adj, user_emb, item_emb, n_layers):
    """Exact f32 semantics of the original torch module."""
    ego = jnp.concatenate([user_emb, item_emb], axis=0)
    all_embs = [ego]
    cur = ego
    for _ in range(n_layers):
        cur = norm_adj @ cur
        all_embs.append(cur)
    mean = jnp.mean(jnp.stack(all_embs, axis=1), axis=1)
    u = user_emb.shape[0]
    return mean[:u], mean[u:]


def lgcn_reference_bf16(norm_adj, user_emb, item_emb, n_layers):
    """Same math as the kernel path (bf16 MXU operands, f32 accumulate)."""
    ego = jnp.concatenate([user_emb, item_emb], axis=0).astype(jnp.float32)
    adj_bf = norm_adj.astype(jnp.bfloat16)
    cur = ego
    acc = ego
    for _ in range(n_layers):
        cur = jnp.dot(adj_bf, cur.astype(jnp.bfloat16),
                      preferred_element_type=jnp.float32)
        acc = acc + cur
    mean = acc / (n_layers + 1)
    u = user_emb.shape[0]
    return mean[:u], mean[u:]


if __name__ == "__main__":
    user_num = 200
    item_num = 312           # N = 512 nodes total -> exercises 2 row tiles
    emb_size = 64            # padded to 128 lanes inside the wrapper
    n_layers = 3

    key = jax.random.PRNGKey(0)
    k_adj, k_u, k_i = jax.random.split(key, 3)

    norm_adj = build_norm_adj(k_adj, user_num, item_num, density=0.1)
    user_emb = xavier_uniform(k_u, (user_num, emb_size))
    item_emb = xavier_uniform(k_i, (item_num, emb_size))

    u_out, i_out = lgcn_encoder_forward(norm_adj, user_emb, item_emb, n_layers)
    u_out = jax.block_until_ready(u_out)
    i_out = jax.block_until_ready(i_out)

    assert u_out.shape == (user_num, emb_size)
    assert i_out.shape == (item_num, emb_size)

    # Tight check against a pure-JAX reference using the same bf16 operands.
    u_bf, i_bf = lgcn_reference_bf16(norm_adj, user_emb, item_emb, n_layers)
    assert jnp.allclose(u_out, u_bf, atol=1e-4, rtol=1e-3)
    assert jnp.allclose(i_out, i_bf, atol=1e-4, rtol=1e-3)

    # Loose check against the full-f32 module semantics (bf16 A quantization).
    u_f32, i_f32 = lgcn_reference_f32(norm_adj, user_emb, item_emb, n_layers)
    assert jnp.allclose(u_out, u_f32, atol=1e-2, rtol=5e-2)
    assert jnp.allclose(i_out, i_f32, atol=1e-2, rtol=5e-2)

    print("KERNEL_OK")
</pallas_src>

<mosaic_0001>
module attributes {stable_mosaic.version = 11 : i64} {
  func.func @_spmm_kernel(%arg0: i32, %arg1: i32, %arg2: memref<256x512xbf16, #tpu.memory_space<vmem>>, %arg3: memref<512x128xbf16, #tpu.memory_space<vmem>>, %arg4: memref<256x128xf32, #tpu.memory_space<vmem>>) attributes {dimension_semantics = [#tpu.dimension_semantics<parallel>, #tpu.dimension_semantics<arbitrary>], iteration_bounds = array<i64: 2, 1>, scalar_prefetch = 0 : i64, scratch_operands = 0 : i64, tpu.core_type = #tpu.core_type<tc>, window_params = [{transform_indices = @transform_0, window_bounds = array<i64: 256, 512>}, {transform_indices = @transform_1, window_bounds = array<i64: 512, 128>}, {transform_indices = @transform_2, window_bounds = array<i64: 256, 128>}]} {
    %c0_i32 = arith.constant 0 : i32
    %0 = arith.cmpi eq, %arg1, %c0_i32 : i32
    %1 = arith.extui %0 : i1 to i32
    %c0_i32_0 = arith.constant 0 : i32
    %2 = arith.cmpi ne, %1, %c0_i32_0 : i32
    scf.if %2 {
      %cst_8 = arith.constant 0.000000e+00 : f32
      %9 = vector.broadcast %cst_8 : f32 to vector<256x128xf32>
      %c0_9 = arith.constant 0 : index
      %c0_10 = arith.constant 0 : index
      %10 = vector.load %arg4[%c0_9, %c0_10] : memref<256x128xf32, #tpu.memory_space<vmem>>, vector<256x128xf32>
      tpu.vector_store %arg4[%c0_9, %c0_10], %9 {strides = array<i32>} : memref<256x128xf32, #tpu.memory_space<vmem>>, vector<256x128xf32>,
    } else {
    }
    %c0 = arith.constant 0 : index
    %c0_1 = arith.constant 0 : index
    %3 = vector.load %arg4[%c0, %c0_1] : memref<256x128xf32, #tpu.memory_space<vmem>>, vector<256x128xf32>
    %c0_2 = arith.constant 0 : index
    %c0_3 = arith.constant 0 : index
    %4 = vector.load %arg2[%c0_2, %c0_3] : memref<256x512xbf16, #tpu.memory_space<vmem>>, vector<256x512xbf16>
    %c0_4 = arith.constant 0 : index
    %c0_5 = arith.constant 0 : index
    %5 = vector.load %arg3[%c0_4, %c0_5] : memref<512x128xbf16, #tpu.memory_space<vmem>>, vector<512x128xbf16>
    %cst = arith.constant dense<0.000000e+00> : vector<256x128xf32>
    %6 = tpu.matmul %4, %5, %cst {dimension_numbers = #tpu.dot_dimension_numbers<[1], [0], [0], [1], [0, 0, 1, 1], [], []>} : vector<256x512xbf16>, vector<512x128xbf16>, vector<256x128xf32> -> vector<256x128xf32>
    %7 = arith.addf %3, %6 : vector<256x128xf32>
    %c0_6 = arith.constant 0 : index
    %c0_7 = arith.constant 0 : index
    %8 = vector.load %arg4[%c0_6, %c0_7] : memref<256x128xf32, #tpu.memory_space<vmem>>, vector<256x128xf32>
    tpu.vector_store %arg4[%c0_6, %c0_7], %7 {strides = array<i32>} : memref<256x128xf32, #tpu.memory_space<vmem>>, vector<256x128xf32>,
    return
  }
  func.func @transform_0(%arg0: i32, %arg1: i32) -> (i32, i32) {
    %c0_i32 = arith.constant 0 : i32
    return %arg0, %arg1 : i32, i32
  }
  func.func @transform_1(%arg0: i32, %arg1: i32) -> (i32, i32) {
    %c0_i32 = arith.constant 0 : i32
    %c0_i32_0 = arith.constant 0 : i32
    return %arg1, %c0_i32 : i32, i32
  }
  func.func @transform_2(%arg0: i32, %arg1: i32) -> (i32, i32) {
    %c0_i32 = arith.constant 0 : i32
    %c0_i32_0 = arith.constant 0 : i32
    return %arg0, %c0_i32 : i32, i32
  }
}

</mosaic_0001>

<llo_original>
// kernel: lgcn_encoder_forward.3
$region0: #{lgcn_encoder_forward.3}
  #allocation0 [shape = 'u32[]', space=smem, size = 0x4, offset = 0x4, fixed_abs, tag = 'smem constant byte address 0x4 - core index']
  #allocation1 [shape = 'u32[144,128]{1,0:T(1,128)}', space=vmem, size = 0x12000, scoped, tag = 'internal scratch']
  %s0 = inlined_call_operand.vmem [shape: bf16[512,512], index: 0, kind: input, shape index: {}]
  %s1 = inlined_call_operand.vmem [shape: bf16[512,128], index: 1, kind: input, shape index: {}]
  %s2 = inlined_call_operand.vmem [shape: f32[512,128], index: 2, kind: output, shape index: {}]
  %s3 = sld [smem:[#allocation0]]
  $region45: #{lgcn_encoder_forward.3} parent=0
    _
  %s5 = ssub.s32 1, %s3
  %s6 = scalar_select 0, %s5, %s3
  loop: start=0, step=1, limit=4
  $region2: #{lgcn_encoder_forward.3} parent=0 // loop_pre_header
    _
  $region3: #{lgcn_encoder_forward.3} parent=0 // loop_header
    %s8 = sphi 0, %s12
    %p9 = scmp.ge.s32.totalorder %s8, 4
    %s15 = sphi 0, %s27
    %s16 = sphi 0, %s23
    %s17 = sphi 0, %s15
    %s18 = sphi 0, %s16
    %s19 = sphi 0, %s17
    %s20 = sphi 0, %s18
    %s32 = sphi 0, %s34
    %s35 = sphi 0, %s32
    %s36 = sphi 0, %s35
    %s52 = sphi 0, %s36
    %s58 = sphi 0, %s60
    %s61 = sphi 0, %s58
    %s62 = sphi 0, %s61
    %s78 = sphi 0, %s62
    %s84 = sphi 0, %s86
    %s87 = sphi 0, %s84
    %s88 = sphi 0, %s87
    %s104 = sphi 0, %s88
  $region4: #{lgcn_encoder_forward.3} parent=0 // loop_header_branch
    %11 = sbr.rel (%p9) target = $region8
  $region5: #{lgcn_encoder_forward.3} parent=0 // loop_body
    %s13 = ssub.s32 %s8, 1
    %s14 = ssub.s32 %s8, 2
    %s21 = sadd.s32 1, %s16
    %p22 = scmp.ge.s32.totalorder %s21, 1
    %s23 = scalar_select %p22, 0, %s21
    %s24 = sadd.s32 1, %s15
    %s25 = scalar_select %p22, %s24, %s15
    %p26 = scmp.ge.s32.totalorder %s25, 2
    %s27 = scalar_select %p26, 0, %s25
    %s28 = ssub.s32 %s15, %s27
    %s29 = ssub.s32 %s16, %s23
    %s30 = sor.u32 %s28, %s29
    %p31 = scmp.eq.s32.totalorder %s30, 0
    %s33 = sadd.s32 %s32, 1
    %s34 = scalar_select %p31, %s32, %s33
    %p37 = pneg %p31
    %p38 = scmp.eq.s32.totalorder %s8, 1
    %p39 = por %p37, %p38
    %p40 = scmp.ne.s32.totalorder %s32, %s35
    %p41 = scmp.eq.s32.totalorder %s8, 0
    %p42 = por %p40, %p41
    %p43 = scmp.ne.s32.totalorder %s32, %s35
    %p44 = scmp.eq.s32.totalorder %s13, 1
    %p45 = por %p43, %p44
    %p46 = scmp.ne.s32.totalorder %s35, %s36
    %p47 = scmp.eq.s32.totalorder %s13, 0
    %p48 = por %p46, %p47
    %p49 = scmp.ne.s32.totalorder %s35, %s36
    %p50 = scmp.eq.s32.totalorder %s14, 1
    %p51 = por %p49, %p50
    %p53 = scmp.ne.s32.totalorder %s36, %s52
    %p54 = scmp.eq.s32.totalorder %s14, 0
    %p55 = por %p53, %p54
    %s56 = ssub.s32 %s16, %s23
    %p57 = scmp.eq.s32.totalorder %s56, 0
    %s59 = sadd.s32 %s58, 1
    %s60 = scalar_select %p57, %s58, %s59
    %p63 = pneg %p57
    %p64 = scmp.eq.s32.totalorder %s8, 1
    %p65 = por %p63, %p64
    %p66 = scmp.ne.s32.totalorder %s58, %s61
    %p67 = scmp.eq.s32.totalorder %s8, 0
    %p68 = por %p66, %p67
    %p69 = scmp.ne.s32.totalorder %s58, %s61
    %p70 = scmp.eq.s32.totalorder %s13, 1
    %p71 = por %p69, %p70
    %p72 = scmp.ne.s32.totalorder %s61, %s62
    %p73 = scmp.eq.s32.totalorder %s13, 0
    %p74 = por %p72, %p73
    %p75 = scmp.ne.s32.totalorder %s61, %s62
    %p76 = scmp.eq.s32.totalorder %s14, 1
    %p77 = por %p75, %p76
    %p79 = scmp.ne.s32.totalorder %s62, %s78
    %p80 = scmp.eq.s32.totalorder %s14, 0
    %p81 = por %p79, %p80
    %s82 = ssub.s32 %s15, %s27
    %p83 = scmp.eq.s32.totalorder %s82, 0
    %s85 = sadd.s32 %s84, 1
    %s86 = scalar_select %p83, %s84, %s85
    %p89 = pneg %p83
    %p90 = scmp.eq.s32.totalorder %s8, 1
    %p91 = por %p89, %p90
    %p92 = scmp.ne.s32.totalorder %s84, %s87
    %p93 = scmp.eq.s32.totalorder %s8, 0
    %p94 = por %p92, %p93
    %p95 = scmp.ne.s32.totalorder %s84, %s87
    %p96 = scmp.eq.s32.totalorder %s13, 1
    %p97 = por %p95, %p96
    %p98 = scmp.ne.s32.totalorder %s87, %s88
    %p99 = scmp.eq.s32.totalorder %s13, 0
    %p100 = por %p98, %p99
    %p101 = scmp.ne.s32.totalorder %s87, %s88
    %p102 = scmp.eq.s32.totalorder %s14, 1
    %p103 = por %p101, %p102
    %p105 = scmp.ne.s32.totalorder %s88, %s104
    %p106 = scmp.eq.s32.totalorder %s14, 0
    %p107 = por %p105, %p106
    %p108 = scmp.le.s32.totalorder 1, %s8
    %p109 = scmp.lt.s32.totalorder %s8, 3
    %p110 = pnand %p108, %p109
    %p111 = pneg %p110
    // Predicated region
    $region9: #{lgcn_encoder_forward.3} parent=5 // pred_check
      _
    $region10: #{lgcn_encoder_forward.3} parent=5 // pred_check_branch
      %113 = sbr.rel (%p110) target = $region12
    $region11: #{lgcn_encoder_forward.3} parent=5 // pred_region
      %s114 = ssub.s32 %s8, 1
      // Predicated region
      $region13: #{lgcn_encoder_forward.3} parent=11 // pred_check
        %p115 = pneg %p74
      $region14: #{lgcn_encoder_forward.3} parent=11 // pred_check_branch
        %117 = sbr.rel (%p115) target = $region16
      $region15: #{lgcn_encoder_forward.3} parent=11 // pred_region
        %s118 = smul.u32 64, %s18
        %p119 = scmp.lt.s32.totalorder %s118, 63
        %s120 = scalar_select %p119, %s118, 63
        %s121 = smul.addr %s120, 4
        %s122 = scalar_lea.vmem %s1, %s121
        %s123 = smul.u32 64, %s18
      $region16: #{lgcn_encoder_forward.3} parent=11 // pred_fallthru
        _
    $region12: #{lgcn_encoder_forward.3} parent=5 // pred_fallthru
      _
    %p124 = scmp.lt.s32.totalorder %s8, 2
    // Predicated region
    $region17: #{lgcn_encoder_forward.3} parent=5 // pred_check
      %p125 = pneg %p124
    $region18: #{lgcn_encoder_forward.3} parent=5 // pred_check_branch
      %127 = sbr.rel (%p125) target = $region20
    $region19: #{lgcn_encoder_forward.3} parent=5 // pred_region
      // Predicated region
      $region21: #{lgcn_encoder_forward.3} parent=19 // pred_check
        %p128 = pneg %p42
      $region22: #{lgcn_encoder_forward.3} parent=19 // pred_check_branch
        %130 = sbr.rel (%p128) target = $region24
      $region23: #{lgcn_encoder_forward.3} parent=19 // pred_region
        %s131 = smul.u32 32, %s15
        %s132 = smul.u32 4, %s16
        %p133 = scmp.lt.s32.totalorder %s131, 63
        %s134 = scalar_select %p133, %s131, 63
        %p135 = scmp.lt.s32.totalorder %s132, 3
        %s136 = scalar_select %p135, %s132, 3
        %s137 = smul.addr %s134, 4
        %s138 = sadd.s32 %s136, %s137
        %s139 = smul.addr %s138, 4
        %s140 = scalar_lea.vmem %s0, %s139
        %s141 = smul.u32 32, %s15
        %s142 = smul.u32 4, %s16
      $region24: #{lgcn_encoder_forward.3} parent=19 // pred_fallthru
        _
    $region20: #{lgcn_encoder_forward.3} parent=5 // pred_fallthru
      _
    %p143 = scmp.le.s32.totalorder 1, %s8
    %p144 = scmp.lt.s32.totalorder %s8, 3
    %p145 = pnand %p143, %p144
    %p146 = pneg %p145
    // Predicated region
    $region25: #{lgcn_encoder_forward.3} parent=5 // pred_check
      _
    $region26: #{lgcn_encoder_forward.3} parent=5 // pred_check_branch
      %148 = sbr.rel (%p145) target = $region28
    $region27: #{lgcn_encoder_forward.3} parent=5 // pred_region
      %s149 = ssub.s32 %s8, 1
      %s150 = smul.u32 32, %s17
      %s151 = smul.u32 4, %s18
      %p152 = scmp.lt.s32.totalorder %s150, 63
      %s153 = scalar_select %p152, %s150, 63
      %p154 = scmp.lt.s32.totalorder %s151, 3
      %s155 = scalar_select %p154, %s151, 3
      %s156 = smul.addr %s153, 4
      %s157 = sadd.s32 %s155, %s156
      %s158 = smul.addr %s157, 4
      %s159 = scalar_lea.vmem %s0, %s158
      %p160 = pneg %p48
      %p161 = pneg %p45
      %s162 = smul.u32 64, %s18
      %p163 = scmp.lt.s32.totalorder %s162, 63
      %s164 = scalar_select %p163, %s162, 63
      %s165 = smul.addr %s164, 4
      %s166 = scalar_lea.vmem %s1, %s165
      %p167 = pneg %p74
      %p168 = pneg %p71
      %p169 = pneg %p100
      %p170 = pneg %p97
      %s171 = smul.u32 32, %s17
      %p172 = scmp.lt.s32.totalorder %s171, 63
      %s173 = scalar_select %p172, %s171, 63
      %s174 = smul.addr %s173, 8
      %s175 = scalar_lea.vmem %s2, %s174
      %s176 = smul.u32 32, %s17
      %s177 = smul.u32 4, %s18
      %p178 = scmp.lt.s32.totalorder %s176, 63
      %s179 = scalar_select %p178, %s176, 63
      %p180 = scmp.lt.s32.totalorder %s177, 3
      %s181 = scalar_select %p180, %s177, 3
      %s182 = smul.addr %s179, 4
      %s183 = sadd.s32 %s181, %s182
      %s184 = smul.addr %s183, 4
      %s185 = scalar_lea.vmem %s0, %s184
      %s186 = smul.u32 32, %s17
      %s187 = smul.u32 4, %s18
      %s188 = smul.u32 64, %s18
      %p189 = scmp.lt.s32.totalorder %s188, 63
      %s190 = scalar_select %p189, %s188, 63
      %s191 = smul.addr %s190, 4
      %s192 = scalar_lea.vmem %s1, %s191
      %s193 = smul.u32 64, %s18
      %s194 = smul.u32 32, %s17
      %p195 = scmp.lt.s32.totalorder %s194, 63
      %s196 = scalar_select %p195, %s194, 63
      %s197 = smul.addr %s196, 8
      %s198 = scalar_lea.vmem %s2, %s197
      %s199 = smul.u32 32, %s17
      %p201 = scmp.eq.s32.totalorder %s18, 0
      // Predicated region
      $region29: #{lgcn_encoder_forward.3} parent=27 // pred_check
        %p202 = pneg %p201
      $region30: #{lgcn_encoder_forward.3} parent=27 // pred_check_branch
        %204 = sbr.rel (%p202) target = $region32
      $region31: #{lgcn_encoder_forward.3} parent=27 // pred_region
        %205 = vst [vmem:[%s198] sm:$0xff] 0.0
        %206 = vst [vmem:[%s198 + $0x8] sm:$0xff] 0.0
        %207 = vst [vmem:[%s198 + $0x10] sm:$0xff] 0.0
        %208 = vst [vmem:[%s198 + $0x18] sm:$0xff] 0.0
        %209 = vst [vmem:[%s198 + $0x20] sm:$0xff] 0.0
        %210 = vst [vmem:[%s198 + $0x28] sm:$0xff] 0.0
        %211 = vst [vmem:[%s198 + $0x30] sm:$0xff] 0.0
        %212 = vst [vmem:[%s198 + $0x38] sm:$0xff] 0.0
        %213 = vst [vmem:[%s198 + $0x40] sm:$0xff] 0.0
        %214 = vst [vmem:[%s198 + $0x48] sm:$0xff] 0.0
        %215 = vst [vmem:[%s198 + $0x50] sm:$0xff] 0.0
        %216 = vst [vmem:[%s198 + $0x58] sm:$0xff] 0.0
        %217 = vst [vmem:[%s198 + $0x60] sm:$0xff] 0.0
        %218 = vst [vmem:[%s198 + $0x68] sm:$0xff] 0.0
        %219 = vst [vmem:[%s198 + $0x70] sm:$0xff] 0.0
        %220 = vst [vmem:[%s198 + $0x78] sm:$0xff] 0.0
        %221 = vst [vmem:[%s198 + $0x80] sm:$0xff] 0.0
        %222 = vst [vmem:[%s198 + $0x88] sm:$0xff] 0.0
        %223 = vst [vmem:[%s198 + $0x90] sm:$0xff] 0.0
        %224 = vst [vmem:[%s198 + $0x98] sm:$0xff] 0.0
        %225 = vst [vmem:[%s198 + $0xa0] sm:$0xff] 0.0
        %226 = vst [vmem:[%s198 + $0xa8] sm:$0xff] 0.0
        %227 = vst [vmem:[%s198 + $0xb0] sm:$0xff] 0.0
        %228 = vst [vmem:[%s198 + $0xb8] sm:$0xff] 0.0
        %229 = vst [vmem:[%s198 + $0xc0] sm:$0xff] 0.0
        %230 = vst [vmem:[%s198 + $0xc8] sm:$0xff] 0.0
        %231 = vst [vmem:[%s198 + $0xd0] sm:$0xff] 0.0
        %232 = vst [vmem:[%s198 + $0xd8] sm:$0xff] 0.0
        %233 = vst [vmem:[%s198 + $0xe0] sm:$0xff] 0.0
        %234 = vst [vmem:[%s198 + $0xe8] sm:$0xff] 0.0
        %235 = vst [vmem:[%s198 + $0xf0] sm:$0xff] 0.0
        %236 = vst [vmem:[%s198 + $0xf8] sm:$0xff] 0.0
      $region32: #{lgcn_encoder_forward.3} parent=27 // pred_fallthru
        _
      %v237 = vld [vmem:[%s198] sm:$0xff]
      %v238 = vld [vmem:[%s198 + $0x8] sm:$0xff]
      %v239 = vld [vmem:[%s198 + $0x10] sm:$0xff]
      %v240 = vld [vmem:[%s198 + $0x18] sm:$0xff]
      %v241 = vld [vmem:[%s198 + $0x20] sm:$0xff]
      %v242 = vld [vmem:[%s198 + $0x28] sm:$0xff]
      %v243 = vld [vmem:[%s198 + $0x30] sm:$0xff]
      %v244 = vld [vmem:[%s198 + $0x38] sm:$0xff]
      %v245 = vld [vmem:[%s198 + $0x40] sm:$0xff]
      %v246 = vld [vmem:[%s198 + $0x48] sm:$0xff]
      %v247 = vld [vmem:[%s198 + $0x50] sm:$0xff]
      %v248 = vld [vmem:[%s198 + $0x58] sm:$0xff]
      %v249 = vld [vmem:[%s198 + $0x60] sm:$0xff]
      %v250 = vld [vmem:[%s198 + $0x68] sm:$0xff]
      %v251 = vld [vmem:[%s198 + $0x70] sm:$0xff]
      %v252 = vld [vmem:[%s198 + $0x78] sm:$0xff]
      %v253 = vld [vmem:[%s198 + $0x80] sm:$0xff]
      %v254 = vld [vmem:[%s198 + $0x88] sm:$0xff]
      %v255 = vld [vmem:[%s198 + $0x90] sm:$0xff]
      %v256 = vld [vmem:[%s198 + $0x98] sm:$0xff]
      %v257 = vld [vmem:[%s198 + $0xa0] sm:$0xff]
      %v258 = vld [vmem:[%s198 + $0xa8] sm:$0xff]
      %v259 = vld [vmem:[%s198 + $0xb0] sm:$0xff]
      %v260 = vld [vmem:[%s198 + $0xb8] sm:$0xff]
      %v261 = vld [vmem:[%s198 + $0xc0] sm:$0xff]
      %v262 = vld [vmem:[%s198 + $0xc8] sm:$0xff]
      %v263 = vld [vmem:[%s198 + $0xd0] sm:$0xff]
      %v264 = vld [vmem:[%s198 + $0xd8] sm:$0xff]
      %v265 = vld [vmem:[%s198 + $0xe0] sm:$0xff]
      %v266 = vld [vmem:[%s198 + $0xe8] sm:$0xff]
      %v267 = vld [vmem:[%s198 + $0xf0] sm:$0xff]
      %v268 = vld [vmem:[%s198 + $0xf8] sm:$0xff]
      %v269 = vld [vmem:[%s185] sm:$0xff]
      %v270 = vld [vmem:[%s185 + $0x8] sm:$0xff]
      %v271 = vld [vmem:[%s185 + $0x10] sm:$0xff]
      %v272 = vld [vmem:[%s185 + $0x18] sm:$0xff]
      %v273 = vld [vmem:[%s185 + $0x20] sm:$0xff]
      %v274 = vld [vmem:[%s185 + $0x28] sm:$0xff]
      %v275 = vld [vmem:[%s185 + $0x30] sm:$0xff]
      %v276 = vld [vmem:[%s185 + $0x38] sm:$0xff]
      %v277 = vld [vmem:[%s185 + $0x40] sm:$0xff]
      %v278 = vld [vmem:[%s185 + $0x48] sm:$0xff]
      %v279 = vld [vmem:[%s185 + $0x50] sm:$0xff]
      %v280 = vld [vmem:[%s185 + $0x58] sm:$0xff]
      %v281 = vld [vmem:[%s185 + $0x60] sm:$0xff]
      %v282 = vld [vmem:[%s185 + $0x68] sm:$0xff]
      %v283 = vld [vmem:[%s185 + $0x70] sm:$0xff]
      %v284 = vld [vmem:[%s185 + $0x78] sm:$0xff]
      %v285 = vld [vmem:[%s185 + $0x80] sm:$0xff]
      %v286 = vld [vmem:[%s185 + $0x88] sm:$0xff]
      %v287 = vld [vmem:[%s185 + $0x90] sm:$0xff]
      %v288 = vld [vmem:[%s185 + $0x98] sm:$0xff]
      %v289 = vld [vmem:[%s185 + $0xa0] sm:$0xff]
      %v290 = vld [vmem:[%s185 + $0xa8] sm:$0xff]
      %v291 = vld [vmem:[%s185 + $0xb0] sm:$0xff]
      %v292 = vld [vmem:[%s185 + $0xb8] sm:$0xff]
      %v293 = vld [vmem:[%s185 + $0xc0] sm:$0xff]
      %v294 = vld [vmem:[%s185 + $0xc8] sm:$0xff]
      %v295 = vld [vmem:[%s185 + $0xd0] sm:$0xff]
      %v296 = vld [vmem:[%s185 + $0xd8] sm:$0xff]
      %v297 = vld [vmem:[%s185 + $0xe0] sm:$0xff]
      %v298 = vld [vmem:[%s185 + $0xe8] sm:$0xff]
      %v299 = vld [vmem:[%s185 + $0xf0] sm:$0xff]
      %v300 = vld [vmem:[%s185 + $0xf8] sm:$0xff]
      %v301 = vld [vmem:[%s185 + $0x100] sm:$0xff]
      %v302 = vld [vmem:[%s185 + $0x108] sm:$0xff]
      %v303 = vld [vmem:[%s185 + $0x110] sm:$0xff]
      %v304 = vld [vmem:[%s185 + $0x118] sm:$0xff]
      %v305 = vld [vmem:[%s185 + $0x120] sm:$0xff]
      %v306 = vld [vmem:[%s185 + $0x128] sm:$0xff]
      %v307 = vld [vmem:[%s185 + $0x130] sm:$0xff]
      %v308 = vld [vmem:[%s185 + $0x138] sm:$0xff]
      %v309 = vld [vmem:[%s185 + $0x140] sm:$0xff]
      %v310 = vld [vmem:[%s185 + $0x148] sm:$0xff]
      %v311 = vld [vmem:[%s185 + $0x150] sm:$0xff]
      %v312 = vld [vmem:[%s185 + $0x158] sm:$0xff]
      %v313 = vld [vmem:[%s185 + $0x160] sm:$0xff]
      %v314 = vld [vmem:[%s185 + $0x168] sm:$0xff]
      %v315 = vld [vmem:[%s185 + $0x170] sm:$0xff]
      %v316 = vld [vmem:[%s185 + $0x178] sm:$0xff]
      %v317 = vld [vmem:[%s185 + $0x180] sm:$0xff]
      %v318 = vld [vmem:[%s185 + $0x188] sm:$0xff]
      %v319 = vld [vmem:[%s185 + $0x190] sm:$0xff]
      %v320 = vld [vmem:[%s185 + $0x198] sm:$0xff]
      %v321 = vld [vmem:[%s185 + $0x1a0] sm:$0xff]
      %v322 = vld [vmem:[%s185 + $0x1a8] sm:$0xff]
      %v323 = vld [vmem:[%s185 + $0x1b0] sm:$0xff]
      %v324 = vld [vmem:[%s185 + $0x1b8] sm:$0xff]
      %v325 = vld [vmem:[%s185 + $0x1c0] sm:$0xff]
      %v326 = vld [vmem:[%s185 + $0x1c8] sm:$0xff]
      %v327 = vld [vmem:[%s185 + $0x1d0] sm:$0xff]
      %v328 = vld [vmem:[%s185 + $0x1d8] sm:$0xff]
      %v329 = vld [vmem:[%s185 + $0x1e0] sm:$0xff]
      %v330 = vld [vmem:[%s185 + $0x1e8] sm:$0xff]
      %v331 = vld [vmem:[%s185 + $0x1f0] sm:$0xff]
      %v332 = vld [vmem:[%s185 + $0x1f8] sm:$0xff]
      %v333 = vld [vmem:[%s192] sm:$0xf]
      %v334 = vld [vmem:[%s192 + $0x4] sm:$0xf]
      %v335 = vld [vmem:[%s192 + $0x8] sm:$0xf]
      %v336 = vld [vmem:[%s192 + $0xc] sm:$0xf]
      %v337 = vld [vmem:[%s192 + $0x10] sm:$0xf]
      %v338 = vld [vmem:[%s192 + $0x14] sm:$0xf]
      %v339 = vld [vmem:[%s192 + $0x18] sm:$0xf]
      %v340 = vld [vmem:[%s192 + $0x1c] sm:$0xf]
      %v341 = vld [vmem:[%s192 + $0x20] sm:$0xf]
      %v342 = vld [vmem:[%s192 + $0x24] sm:$0xf]
      %v343 = vld [vmem:[%s192 + $0x28] sm:$0xf]
      %v344 = vld [vmem:[%s192 + $0x2c] sm:$0xf]
      %v345 = vld [vmem:[%s192 + $0x30] sm:$0xf]
      %v346 = vld [vmem:[%s192 + $0x34] sm:$0xf]
      %v347 = vld [vmem:[%s192 + $0x38] sm:$0xf]
      %v348 = vld [vmem:[%s192 + $0x3c] sm:$0xf]
      %v349 = vld [vmem:[%s192 + $0x40] sm:$0xf]
      %v350 = vld [vmem:[%s192 + $0x44] sm:$0xf]
      %v351 = vld [vmem:[%s192 + $0x48] sm:$0xf]
      %v352 = vld [vmem:[%s192 + $0x4c] sm:$0xf]
      %v353 = vld [vmem:[%s192 + $0x50] sm:$0xf]
      %v354 = vld [vmem:[%s192 + $0x54] sm:$0xf]
      %v355 = vld [vmem:[%s192 + $0x58] sm:$0xf]
      %v356 = vld [vmem:[%s192 + $0x5c] sm:$0xf]
      %v357 = vld [vmem:[%s192 + $0x60] sm:$0xf]
      %v358 = vld [vmem:[%s192 + $0x64] sm:$0xf]
      %v359 = vld [vmem:[%s192 + $0x68] sm:$0xf]
      %v360 = vld [vmem:[%s192 + $0x6c] sm:$0xf]
      %v361 = vld [vmem:[%s192 + $0x70] sm:$0xf]
      %v362 = vld [vmem:[%s192 + $0x74] sm:$0xf]
      %v363 = vld [vmem:[%s192 + $0x78] sm:$0xf]
      %v364 = vld [vmem:[%s192 + $0x7c] sm:$0xf]
      %v365 = vld [vmem:[%s192 + $0x80] sm:$0xf]
      %v366 = vld [vmem:[%s192 + $0x84] sm:$0xf]
      %v367 = vld [vmem:[%s192 + $0x88] sm:$0xf]
      %v368 = vld [vmem:[%s192 + $0x8c] sm:$0xf]
      %v369 = vld [vmem:[%s192 + $0x90] sm:$0xf]
      %v370 = vld [vmem:[%s192 + $0x94] sm:$0xf]
      %v371 = vld [vmem:[%s192 + $0x98] sm:$0xf]
      %v372 = vld [vmem:[%s192 + $0x9c] sm:$0xf]
      %v373 = vld [vmem:[%s192 + $0xa0] sm:$0xf]
      %v374 = vld [vmem:[%s192 + $0xa4] sm:$0xf]
      %v375 = vld [vmem:[%s192 + $0xa8] sm:$0xf]
      %v376 = vld [vmem:[%s192 + $0xac] sm:$0xf]
      %v377 = vld [vmem:[%s192 + $0xb0] sm:$0xf]
      %v378 = vld [vmem:[%s192 + $0xb4] sm:$0xf]
      %v379 = vld [vmem:[%s192 + $0xb8] sm:$0xf]
      %v380 = vld [vmem:[%s192 + $0xbc] sm:$0xf]
      %v381 = vld [vmem:[%s192 + $0xc0] sm:$0xf]
      %v382 = vld [vmem:[%s192 + $0xc4] sm:$0xf]
      %v383 = vld [vmem:[%s192 + $0xc8] sm:$0xf]
      %v384 = vld [vmem:[%s192 + $0xcc] sm:$0xf]
      %v385 = vld [vmem:[%s192 + $0xd0] sm:$0xf]
      %v386 = vld [vmem:[%s192 + $0xd4] sm:$0xf]
      %v387 = vld [vmem:[%s192 + $0xd8] sm:$0xf]
      %v388 = vld [vmem:[%s192 + $0xdc] sm:$0xf]
      %v389 = vld [vmem:[%s192 + $0xe0] sm:$0xf]
      %v390 = vld [vmem:[%s192 + $0xe4] sm:$0xf]
      %v391 = vld [vmem:[%s192 + $0xe8] sm:$0xf]
      %v392 = vld [vmem:[%s192 + $0xec] sm:$0xf]
      %v393 = vld [vmem:[%s192 + $0xf0] sm:$0xf]
      %v394 = vld [vmem:[%s192 + $0xf4] sm:$0xf]
      %v395 = vld [vmem:[%s192 + $0xf8] sm:$0xf]
      %v396 = vld [vmem:[%s192 + $0xfc] sm:$0xf]
      %v461 = vunpack.c.l.b16 %v269
      %v462 = vunpack.c.h.b16 %v269
      %v463 = vunpack.c.l.b16 %v270
      %v464 = vunpack.c.h.b16 %v270
      %v465 = vunpack.c.l.b16 %v271
      %v466 = vunpack.c.h.b16 %v271
      %v467 = vunpack.c.l.b16 %v272
      %v468 = vunpack.c.h.b16 %v272
      %v469 = vunpack.c.l.b16 %v273
      %v470 = vunpack.c.h.b16 %v273
      %v471 = vunpack.c.l.b16 %v274
      %v472 = vunpack.c.h.b16 %v274
      %v473 = vunpack.c.l.b16 %v275
      %v474 = vunpack.c.h.b16 %v275
      %v475 = vunpack.c.l.b16 %v276
      %v476 = vunpack.c.h.b16 %v276
      %v477 = vunpack.c.l.b16 %v277
      %v478 = vunpack.c.h.b16 %v277
      %v479 = vunpack.c.l.b16 %v278
      %v480 = vunpack.c.h.b16 %v278
      %v481 = vunpack.c.l.b16 %v279
      %v482 = vunpack.c.h.b16 %v279
      %v483 = vunpack.c.l.b16 %v280
      %v484 = vunpack.c.h.b16 %v280
      %v485 = vunpack.c.l.b16 %v281
      %v486 = vunpack.c.h.b16 %v281
      %v487 = vunpack.c.l.b16 %v282
      %v488 = vunpack.c.h.b16 %v282
      %v489 = vunpack.c.l.b16 %v283
      %v490 = vunpack.c.h.b16 %v283
      %v491 = vunpack.c.l.b16 %v284
      %v492 = vunpack.c.h.b16 %v284
      %v493 = vunpack.c.l.b16 %v285
      %v494 = vunpack.c.h.b16 %v285
      %v495 = vunpack.c.l.b16 %v286
      %v496 = vunpack.c.h.b16 %v286
      %v497 = vunpack.c.l.b16 %v287
      %v498 = vunpack.c.h.b16 %v287
      %v499 = vunpack.c.l.b16 %v288
      %v500 = vunpack.c.h.b16 %v288
      %v501 = vunpack.c.l.b16 %v289
      %v502 = vunpack.c.h.b16 %v289
      %v503 = vunpack.c.l.b16 %v290
      %v504 = vunpack.c.h.b16 %v290
      %v505 = vunpack.c.l.b16 %v291
      %v506 = vunpack.c.h.b16 %v291
      %v507 = vunpack.c.l.b16 %v292
      %v508 = vunpack.c.h.b16 %v292
      %v509 = vunpack.c.l.b16 %v293
      %v510 = vunpack.c.h.b16 %v293
      %v511 = vunpack.c.l.b16 %v294
      %v512 = vunpack.c.h.b16 %v294
      %v513 = vunpack.c.l.b16 %v295
      %v514 = vunpack.c.h.b16 %v295
      %v515 = vunpack.c.l.b16 %v296
      %v516 = vunpack.c.h.b16 %v296
      %v517 = vunpack.c.l.b16 %v297
      %v518 = vunpack.c.h.b16 %v297
      %v519 = vunpack.c.l.b16 %v298
      %v520 = vunpack.c.h.b16 %v298
      %v521 = vunpack.c.l.b16 %v299
      %v522 = vunpack.c.h.b16 %v299
      %v523 = vunpack.c.l.b16 %v300
      %v524 = vunpack.c.h.b16 %v300
      %v525 = vunpack.c.l.b16 %v301
      %v526 = vunpack.c.h.b16 %v301
      %v527 = vunpack.c.l.b16 %v302
      %v528 = vunpack.c.h.b16 %v302
      %v529 = vunpack.c.l.b16 %v303
      %v530 = vunpack.c.h.b16 %v303
      %v531 = vunpack.c.l.b16 %v304
      %v532 = vunpack.c.h.b16 %v304
      %v533 = vunpack.c.l.b16 %v305
      %v534 = vunpack.c.h.b16 %v305
      %v535 = vunpack.c.l.b16 %v306
      %v536 = vunpack.c.h.b16 %v306
      %v537 = vunpack.c.l.b16 %v307
      %v538 = vunpack.c.h.b16 %v307
      %v539 = vunpack.c.l.b16 %v308
      %v540 = vunpack.c.h.b16 %v308
      %v541 = vunpack.c.l.b16 %v309
      %v542 = vunpack.c.h.b16 %v309
      %v543 = vunpack.c.l.b16 %v310
      %v544 = vunpack.c.h.b16 %v310
      %v545 = vunpack.c.l.b16 %v311
      %v546 = vunpack.c.h.b16 %v311
      %v547 = vunpack.c.l.b16 %v312
      %v548 = vunpack.c.h.b16 %v312
      %v549 = vunpack.c.l.b16 %v313
      %v550 = vunpack.c.h.b16 %v313
      %v551 = vunpack.c.l.b16 %v314
      %v552 = vunpack.c.h.b16 %v314
      %v553 = vunpack.c.l.b16 %v315
      %v554 = vunpack.c.h.b16 %v315
      %v555 = vunpack.c.l.b16 %v316
      %v556 = vunpack.c.h.b16 %v316
      %v557 = vunpack.c.l.b16 %v317
      %v558 = vunpack.c.h.b16 %v317
      %v559 = vunpack.c.l.b16 %v318
      %v560 = vunpack.c.h.b16 %v318
      %v561 = vunpack.c.l.b16 %v319
      %v562 = vunpack.c.h.b16 %v319
      %v563 = vunpack.c.l.b16 %v320
      %v564 = vunpack.c.h.b16 %v320
      %v565 = vunpack.c.l.b16 %v321
      %v566 = vunpack.c.h.b16 %v321
      %v567 = vunpack.c.l.b16 %v322
      %v568 = vunpack.c.h.b16 %v322
      %v569 = vunpack.c.l.b16 %v323
      %v570 = vunpack.c.h.b16 %v323
      %v571 = vunpack.c.l.b16 %v324
      %v572 = vunpack.c.h.b16 %v324
      %v573 = vunpack.c.l.b16 %v325
      %v574 = vunpack.c.h.b16 %v325
      %v575 = vunpack.c.l.b16 %v326
      %v576 = vunpack.c.h.b16 %v326
      %v577 = vunpack.c.l.b16 %v327
      %v578 = vunpack.c.h.b16 %v327
      %v579 = vunpack.c.l.b16 %v328
      %v580 = vunpack.c.h.b16 %v328
      %v581 = vunpack.c.l.b16 %v329
      %v582 = vunpack.c.h.b16 %v329
      %v583 = vunpack.c.l.b16 %v330
      %v584 = vunpack.c.h.b16 %v330
      %v585 = vunpack.c.l.b16 %v331
      %v586 = vunpack.c.h.b16 %v331
      %v587 = vunpack.c.l.b16 %v332
      %v588 = vunpack.c.h.b16 %v332
      %v589 = vpack.c.b16 %v465, %v461
      %v590 = vpack.c.b16 %v466, %v462
      %v591 = vpack.c.b16 %v467, %v463
      %v592 = vpack.c.b16 %v468, %v464
      %v593 = vpack.c.b16 %v473, %v469
      %v594 = vpack.c.b16 %v474, %v470
      %v595 = vpack.c.b16 %v475, %v471
      %v596 = vpack.c.b16 %v476, %v472
      %v597 = vpack.c.b16 %v481, %v477
      %v598 = vpack.c.b16 %v482, %v478
      %v599 = vpack.c.b16 %v483, %v479
      %v600 = vpack.c.b16 %v484, %v480
      %v601 = vpack.c.b16 %v489, %v485
      %v602 = vpack.c.b16 %v490, %v486
      %v603 = vpack.c.b16 %v491, %v487
      %v604 = vpack.c.b16 %v492, %v488
      %v605 = vpack.c.b16 %v497, %v493
      %v606 = vpack.c.b16 %v498, %v494
      %v607 = vpack.c.b16 %v499, %v495
      %v608 = vpack.c.b16 %v500, %v496
      %v609 = vpack.c.b16 %v505, %v501
      %v610 = vpack.c.b16 %v506, %v502
      %v611 = vpack.c.b16 %v507, %v503
      %v612 = vpack.c.b16 %v508, %v504
      %v613 = vpack.c.b16 %v513, %v509
      %v614 = vpack.c.b16 %v514, %v510
      %v615 = vpack.c.b16 %v515, %v511
      %v616 = vpack.c.b16 %v516, %v512
      %v617 = vpack.c.b16 %v521, %v517
      %v618 = vpack.c.b16 %v522, %v518
      %v619 = vpack.c.b16 %v523, %v519
      %v620 = vpack.c.b16 %v524, %v520
      %v621 = vpack.c.b16 %v529, %v525
      %v622 = vpack.c.b16 %v530, %v526
      %v623 = vpack.c.b16 %v531, %v527
      %v624 = vpack.c.b16 %v532, %v528
      %v625 = vpack.c.b16 %v537, %v533
      %v626 = vpack.c.b16 %v538, %v534
      %v627 = vpack.c.b16 %v539, %v535
      %v628 = vpack.c.b16 %v540, %v536
      %v629 = vpack.c.b16 %v545, %v541
      %v630 = vpack.c.b16 %v546, %v542
      %v631 = vpack.c.b16 %v547, %v543
      %v632 = vpack.c.b16 %v548, %v544
      %v633 = vpack.c.b16 %v553, %v549
      %v634 = vpack.c.b16 %v554, %v550
      %v635 = vpack.c.b16 %v555, %v551
      %v636 = vpack.c.b16 %v556, %v552
      %v637 = vpack.c.b16 %v561, %v557
      %v638 = vpack.c.b16 %v562, %v558
      %v639 = vpack.c.b16 %v563, %v559
      %v640 = vpack.c.b16 %v564, %v560
      %v641 = vpack.c.b16 %v569, %v565
      %v642 = vpack.c.b16 %v570, %v566
      %v643 = vpack.c.b16 %v571, %v567
      %v644 = vpack.c.b16 %v572, %v568
      %v645 = vpack.c.b16 %v577, %v573
      %v646 = vpack.c.b16 %v578, %v574
      %v647 = vpack.c.b16 %v579, %v575
      %v648 = vpack.c.b16 %v580, %v576
      %v649 = vpack.c.b16 %v585, %v581
      %v650 = vpack.c.b16 %v586, %v582
      %v651 = vpack.c.b16 %v587, %v583
      %v652 = vpack.c.b16 %v588, %v584
      %v781 = vunpack.c.l.b16 %v333
      %v782 = vunpack.c.l.b16 %v334
      %v783 = vunpack.c.l.b16 %v335
      %v784 = vunpack.c.l.b16 %v336
      %v785 = vunpack.c.l.b16 %v337
      %v786 = vunpack.c.l.b16 %v338
      %v787 = vunpack.c.l.b16 %v339
      %v788 = vunpack.c.l.b16 %v340
      %v789 = vunpack.c.l.b16 %v341
      %v790 = vunpack.c.l.b16 %v342
      %v791 = vunpack.c.l.b16 %v343
      %v792 = vunpack.c.l.b16 %v344
      %v793 = vunpack.c.l.b16 %v345
      %v794 = vunpack.c.l.b16 %v346
      %v795 = vunpack.c.l.b16 %v347
      %v796 = vunpack.c.l.b16 %v348
      %v797 = vunpack.c.l.b16 %v349
      %v798 = vunpack.c.l.b16 %v350
      %v799 = vunpack.c.l.b16 %v351
      %v800 = vunpack.c.l.b16 %v352
      %v801 = vunpack.c.l.b16 %v353
      %v802 = vunpack.c.l.b16 %v354
      %v803 = vunpack.c.l.b16 %v355
      %v804 = vunpack.c.l.b16 %v356
      %v805 = vunpack.c.l.b16 %v357
      %v806 = vunpack.c.l.b16 %v358
      %v807 = vunpack.c.l.b16 %v359
      %v808 = vunpack.c.l.b16 %v360
      %v809 = vunpack.c.l.b16 %v361
      %v810 = vunpack.c.l.b16 %v362
      %v811 = vunpack.c.l.b16 %v363
      %v812 = vunpack.c.l.b16 %v364
      %v813 = vunpack.c.l.b16 %v365
      %v814 = vunpack.c.l.b16 %v366
      %v815 = vunpack.c.l.b16 %v367
      %v816 = vunpack.c.l.b16 %v368
      %v817 = vunpack.c.l.b16 %v369
      %v818 = vunpack.c.l.b16 %v370
      %v819 = vunpack.c.l.b16 %v371
      %v820 = vunpack.c.l.b16 %v372
      %v821 = vunpack.c.l.b16 %v373
      %v822 = vunpack.c.l.b16 %v374
      %v823 = vunpack.c.l.b16 %v375
      %v824 = vunpack.c.l.b16 %v376
      %v825 = vunpack.c.l.b16 %v377
      %v826 = vunpack.c.l.b16 %v378
      %v827 = vunpack.c.l.b16 %v379
      %v828 = vunpack.c.l.b16 %v380
      %v829 = vunpack.c.l.b16 %v381
      %v830 = vunpack.c.l.b16 %v382
      %v831 = vunpack.c.l.b16 %v383
      %v832 = vunpack.c.l.b16 %v384
      %v833 = vunpack.c.l.b16 %v385
      %v834 = vunpack.c.l.b16 %v386
      %v835 = vunpack.c.l.b16 %v387
      %v836 = vunpack.c.l.b16 %v388
      %v837 = vunpack.c.l.b16 %v389
      %v838 = vunpack.c.l.b16 %v390
      %v839 = vunpack.c.l.b16 %v391
      %v840 = vunpack.c.l.b16 %v392
      %v841 = vunpack.c.l.b16 %v393
      %v842 = vunpack.c.l.b16 %v394
      %v843 = vunpack.c.l.b16 %v395
      %v844 = vunpack.c.l.b16 %v396
      %v845 = vpack.c.b16 %v782, %v781
      %v846 = vpack.c.b16 %v784, %v783
      %v847 = vpack.c.b16 %v786, %v785
      %v848 = vpack.c.b16 %v788, %v787
      %v849 = vpack.c.b16 %v790, %v789
      %v850 = vpack.c.b16 %v792, %v791
      %v851 = vpack.c.b16 %v794, %v793
      %v852 = vpack.c.b16 %v796, %v795
      %v853 = vpack.c.b16 %v798, %v797
      %v854 = vpack.c.b16 %v800, %v799
      %v855 = vpack.c.b16 %v802, %v801
      %v856 = vpack.c.b16 %v804, %v803
      %v857 = vpack.c.b16 %v806, %v805
      %v858 = vpack.c.b16 %v808, %v807
      %v859 = vpack.c.b16 %v810, %v809
      %v860 = vpack.c.b16 %v812, %v811
      %v861 = vpack.c.b16 %v814, %v813
      %v862 = vpack.c.b16 %v816, %v815
      %v863 = vpack.c.b16 %v818, %v817
      %v864 = vpack.c.b16 %v820, %v819
      %v865 = vpack.c.b16 %v822, %v821
      %v866 = vpack.c.b16 %v824, %v823
      %v867 = vpack.c.b16 %v826, %v825
      %v868 = vpack.c.b16 %v828, %v827
      %v869 = vpack.c.b16 %v830, %v829
      %v870 = vpack.c.b16 %v832, %v831
      %v871 = vpack.c.b16 %v834, %v833
      %v872 = vpack.c.b16 %v836, %v835
      %v873 = vpack.c.b16 %v838, %v837
      %v874 = vpack.c.b16 %v840, %v839
      %v875 = vpack.c.b16 %v842, %v841
      %v876 = vpack.c.b16 %v844, %v843
      %909 = vmatprep.subr.bf16.mxu0 0
      %910 = vmatpush1.bf16.msra.mxu0 %v845
      %911 = vmatprep.subr.bf16.mxu0 0
      %912 = vmatpush1.bf16.msra.mxu0 %v846
      %913 = vmatprep.subr.bf16.mxu0 0
      %914 = vmatpush1.bf16.msra.mxu0 %v847
      %915 = vmatprep.subr.bf16.mxu0 0
      %916 = vmatpush1.bf16.msra.mxu0 %v848
      %917 = vmatprep.subr.bf16.mxu0 0
      %918 = vmatpush1.bf16.msra.mxu0 %v849
      %919 = vmatprep.subr.bf16.mxu0 0
      %920 = vmatpush1.bf16.msra.mxu0 %v850
      %921 = vmatprep.subr.bf16.mxu0 0
      %922 = vmatpush1.bf16.msra.mxu0 %v851
      %923 = vmatprep.subr.bf16.mxu0 0
      %924 = vmatpush1.bf16.msra.mxu0 %v852
      %925 = vmatprep.subr.bf16.mxu0 0
      %926 = vmatpush1.bf16.msra.mxu0 %v853
      %927 = vmatprep.subr.bf16.mxu0 0
      %928 = vmatpush1.bf16.msra.mxu0 %v854
      %929 = vmatprep.subr.bf16.mxu0 0
      %930 = vmatpush1.bf16.msra.mxu0 %v855
      %931 = vmatprep.subr.bf16.mxu0 0
      %932 = vmatpush1.bf16.msra.mxu0 %v856
      %933 = vmatprep.subr.bf16.mxu0 0
      %934 = vmatpush1.bf16.msra.mxu0 %v857
      %935 = vmatprep.subr.bf16.mxu0 0
      %936 = vmatpush1.bf16.msra.mxu0 %v858
      %937 = vmatprep.subr.bf16.mxu0 0
      %938 = vmatpush1.bf16.msra.mxu0 %v859
      %939 = vmatprep.subr.bf16.mxu0 0
      %940 = vmatpush1.bf16.msra.mxu0 %v860
      %941 = vmatprep.mubr.bf16.mxu0 %v590
      %942 = vmatmul.mubr.bf16.gmra.mrb[0].mxu0 %v589
      %v943 = vpop.f32.mrb[0].mxu0
      %v944 = vadd.f32 0.0, %v943
      %v945 = vpop.f32.mrb[0].mxu0
      %v946 = vpop.f32.mrb[0].mxu0
      %v947 = vadd.f32 0.0, %v946
      %v948 = vpop.f32.mrb[0].mxu0
      %949 = vmatprep.mubr.bf16.mxu0 %v594
      %950 = vmatmul.mubr.bf16.gmra.mrb[0].mxu0 %v593
      %v951 = vpop.f32.mrb[0].mxu0
      %v952 = vadd.f32 0.0, %v951
      %v953 = vpop.f32.mrb[0].mxu0
      %v954 = vpop.f32.mrb[0].mxu0
      %v955 = vadd.f32 0.0, %v954
      %v956 = vpop.f32.mrb[0].mxu0
      %957 = vmatprep.mubr.bf16.mxu0 %v598
      %958 = vmatmul.mubr.bf16.gmra.mrb[0].mxu0 %v597
      %v959 = vpop.f32.mrb[0].mxu0
      %v960 = vadd.f32 0.0, %v959
      %v961 = vpop.f32.mrb[0].mxu0
      %v962 = vpop.f32.mrb[0].mxu0
      %v963 = vadd.f32 0.0, %v962
      %v964 = vpop.f32.mrb[0].mxu0
      %965 = vmatprep.mubr.bf16.mxu0 %v602
      %966 = vmatmul.mubr.bf16.gmra.mrb[0].mxu0 %v601
      %v967 = vpop.f32.mrb[0].mxu0
      %v968 = vadd.f32 0.0, %v967
      %v969 = vpop.f32.mrb[0].mxu0
      %v970 = vpop.f32.mrb[0].mxu0
      %v971 = vadd.f32 0.0, %v970
      %v972 = vpop.f32.mrb[0].mxu0
      %973 = vmatprep.mubr.bf16.mxu0 %v606
      %974 = vmatmul.mubr.bf16.gmra.mrb[0].mxu0 %v605
      %v975 = vpop.f32.mrb[0].mxu0
      %v976 = vadd.f32 0.0, %v975
      %v977 = vpop.f32.mrb[0].mxu0
      %v978 = vpop.f32.mrb[0].mxu0
      %v979 = vadd.f32 0.0, %v978
      %v980 = vpop.f32.mrb[0].mxu0
      %981 = vmatprep.mubr.bf16.mxu0 %v610
      %982 = vmatmul.mubr.bf16.gmra.mrb[0].mxu0 %v609
      %v983 = vpop.f32.mrb[0].mxu0
      %v984 = vadd.f32 0.0, %v983
      %v985 = vpop.f32.mrb[0].mxu0
      %v986 = vpop.f32.mrb[0].mxu0
      %v987 = vadd.f32 0.0, %v986
      %v988 = vpop.f32.mrb[0].mxu0
      %989 = vmatprep.mubr.bf16.mxu0 %v614
      %990 = vmatmul.mubr.bf16.gmra.mrb[0].mxu0 %v613
      %v991 = vpop.f32.mrb[0].mxu0
      %v992 = vadd.f32 0.0, %v991
      %v993 = vpop.f32.mrb[0].mxu0
      %v994 = vpop.f32.mrb[0].mxu0
      %v995 = vadd.f32 0.0, %v994
      %v996 = vpop.f32.mrb[0].mxu0
      %997 = vmatprep.mubr.bf16.mxu0 %v618
      %998 = vmatmul.mubr.bf16.gmra.mrb[0].mxu0 %v617
      %v999 = vpop.f32.mrb[0].mxu0
      %v1000 = vadd.f32 0.0, %v999
      %v1001 = vpop.f32.mrb[0].mxu0
      %v1002 = vpop.f32.mrb[0].mxu0
      %v1003 = vadd.f32 0.0, %v1002
      %v1004 = vpop.f32.mrb[0].mxu0
      %1005 = vmatprep.mubr.bf16.mxu0 %v622
      %1006 = vmatmul.mubr.bf16.gmra.mrb[0].mxu0 %v621
      %v1007 = vpop.f32.mrb[0].mxu0
      %v1008 = vadd.f32 0.0, %v1007
      %v1009 = vpop.f32.mrb[0].mxu0
      %v1010 = vpop.f32.mrb[0].mxu0
      %v1011 = vadd.f32 0.0, %v1010
      %v1012 = vpop.f32.mrb[0].mxu0
      %1013 = vmatprep.mubr.bf16.mxu0 %v626
      %1014 = vmatmul.mubr.bf16.gmra.mrb[0].mxu0 %v625
      %v1015 = vpop.f32.mrb[0].mxu0
      %v1016 = vadd.f32 0.0, %v1015
      %v1017 = vpop.f32.mrb[0].mxu0
      %v1018 = vpop.f32.mrb[0].mxu0
      %v1019 = vadd.f32 0.0, %v1018
      %v1020 = vpop.f32.mrb[0].mxu0
      %1021 = vmatprep.mubr.bf16.mxu0 %v630
      %1022 = vmatmul.mubr.bf16.gmra.mrb[0].mxu0 %v629
      %v1023 = vpop.f32.mrb[0].mxu0
      %v1024 = vadd.f32 0.0, %v1023
      %v1025 = vpop.f32.mrb[0].mxu0
      %v1026 = vpop.f32.mrb[0].mxu0
      %v1027 = vadd.f32 0.0, %v1026
      %v1028 = vpop.f32.mrb[0].mxu0
      %1029 = vmatprep.mubr.bf16.mxu0 %v634
      %1030 = vmatmul.mubr.bf16.gmra.mrb[0].mxu0 %v633
      %v1031 = vpop.f32.mrb[0].mxu0
      %v1032 = vadd.f32 0.0, %v1031
      %v1033 = vpop.f32.mrb[0].mxu0
      %v1034 = vpop.f32.mrb[0].mxu0
      %v1035 = vadd.f32 0.0, %v1034
      %v1036 = vpop.f32.mrb[0].mxu0
      %1037 = vmatprep.mubr.bf16.mxu0 %v638
      %1038 = vmatmul.mubr.bf16.gmra.mrb[0].mxu0 %v637
      %v1039 = vpop.f32.mrb[0].mxu0
      %v1040 = vadd.f32 0.0, %v1039
      %v1041 = vpop.f32.mrb[0].mxu0
      %v1042 = vpop.f32.mrb[0].mxu0
      %v1043 = vadd.f32 0.0, %v1042
      %v1044 = vpop.f32.mrb[0].mxu0
      %1045 = vmatprep.mubr.bf16.mxu0 %v642
      %1046 = vmatmul.mubr.bf16.gmra.mrb[0].mxu0 %v641
      %v1047 = vpop.f32.mrb[0].mxu0
      %v1048 = vadd.f32 0.0, %v1047
      %v1049 = vpop.f32.mrb[0].mxu0
      %v1050 = vpop.f32.mrb[0].mxu0
      %v1051 = vadd.f32 0.0, %v1050
      %v1052 = vpop.f32.mrb[0].mxu0
      %1053 = vmatprep.mubr.bf16.mxu0 %v646
      %1054 = vmatmul.mubr.bf16.gmra.mrb[0].mxu0 %v645
      %v1055 = vpop.f32.mrb[0].mxu0
      %v1056 = vadd.f32 0.0, %v1055
      %v1057 = vpop.f32.mrb[0].mxu0
      %v1058 = vpop.f32.mrb[0].mxu0
      %v1059 = vadd.f32 0.0, %v1058
      %v1060 = vpop.f32.mrb[0].mxu0
      %1061 = vmatprep.mubr.bf16.mxu0 %v650
      %1062 = vmatmul.mubr.bf16.gmra.mrb[0].mxu0 %v649
      %v1063 = vpop.f32.mrb[0].mxu0
      %v1064 = vadd.f32 0.0, %v1063
      %v1065 = vpop.f32.mrb[0].mxu0
      %v1066 = vpop.f32.mrb[0].mxu0
      %v1067 = vadd.f32 0.0, %v1066
      %v1068 = vpop.f32.mrb[0].mxu0
      %1069 = vdwg.mxu0
      %1070 = vmatprep.subr.bf16.mxu0 0
      %1071 = vmatpush1.bf16.msra.mxu0 %v861
      %1072 = vmatprep.subr.bf16.mxu0 0
      %1073 = vmatpush1.bf16.msra.mxu0 %v862
      %1074 = vmatprep.subr.bf16.mxu0 0
      %1075 = vmatpush1.bf16.msra.mxu0 %v863
      %1076 = vmatprep.subr.bf16.mxu0 0
      %1077 = vmatpush1.bf16.msra.mxu0 %v864
      %1078 = vmatprep.subr.bf16.mxu0 0
      %1079 = vmatpush1.bf16.msra.mxu0 %v865
      %1080 = vmatprep.subr.bf16.mxu0 0
      %1081 = vmatpush1.bf16.msra.mxu0 %v866
      %1082 = vmatprep.subr.bf16.mxu0 0
      %1083 = vmatpush1.bf16.msra.mxu0 %v867
      %1084 = vmatprep.subr.bf16.mxu0 0
      %1085 = vmatpush1.bf16.msra.mxu0 %v868
      %1086 = vmatprep.subr.bf16.mxu0 0
      %1087 = vmatpush1.bf16.msra.mxu0 %v869
      %1088 = vmatprep.subr.bf16.mxu0 0
      %1089 = vmatpush1.bf16.msra.mxu0 %v870
      %1090 = vmatprep.subr.bf16.mxu0 0
      %1091 = vmatpush1.bf16.msra.mxu0 %v871
      %1092 = vmatprep.subr.bf16.mxu0 0
      %1093 = vmatpush1.bf16.msra.mxu0 %v872
      %1094 = vmatprep.subr.bf16.mxu0 0
      %1095 = vmatpush1.bf16.msra.mxu0 %v873
      %1096 = vmatprep.subr.bf16.mxu0 0
      %1097 = vmatpush1.bf16.msra.mxu0 %v874
      %1098 = vmatprep.subr.bf16.mxu0 0
      %1099 = vmatpush1.bf16.msra.mxu0 %v875
      %1100 = vmatprep.subr.bf16.mxu0 0
      %1101 = vmatpush1.bf16.msra.mxu0 %v876
      %1102 = vmatprep.mubr.bf16.mxu0 %v592
      %1103 = vmatmul.mubr.bf16.gmra.mrb[0].mxu0 %v591
      %v1104 = vpop.f32.mrb[0].mxu0
      %v1105 = vadd.f32 %v944, %v1104
      %v1106 = vpop.f32.mrb[0].mxu0
      %v1107 = vpop.f32.mrb[0].mxu0
      %v1108 = vadd.f32 %v947, %v1107
      %v1109 = vpop.f32.mrb[0].mxu0
      %1110 = vmatprep.mubr.bf16.mxu0 %v596
      %1111 = vmatmul.mubr.bf16.gmra.mrb[0].mxu0 %v595
      %v1112 = vpop.f32.mrb[0].mxu0
      %v1113 = vadd.f32 %v952, %v1112
      %v1114 = vpop.f32.mrb[0].mxu0
      %v1115 = vpop.f32.mrb[0].mxu0
      %v1116 = vadd.f32 %v955, %v1115
      %v1117 = vpop.f32.mrb[0].mxu0
      %1118 = vmatprep.mubr.bf16.mxu0 %v600
      %1119 = vmatmul.mubr.bf16.gmra.mrb[0].mxu0 %v599
      %v1120 = vpop.f32.mrb[0].mxu0
      %v1121 = vadd.f32 %v960, %v1120
      %v1122 = vpop.f32.mrb[0].mxu0
      %v1123 = vpop.f32.mrb[0].mxu0
      %v1124 = vadd.f32 %v963, %v1123
      %v1125 = vpop.f32.mrb[0].mxu0
      %1126 = vmatprep.mubr.bf16.mxu0 %v604
      %1127 = vmatmul.mubr.bf16.gmra.mrb[0].mxu0 %v603
      %v1128 = vpop.f32.mrb[0].mxu0
      %v1129 = vadd.f32 %v968, %v1128
      %v1130 = vpop.f32.mrb[0].mxu0
      %v1131 = vpop.f32.mrb[0].mxu0
      %v1132 = vadd.f32 %v971, %v1131
      %v1133 = vpop.f32.mrb[0].mxu0
      %1134 = vmatprep.mubr.bf16.mxu0 %v608
      %1135 = vmatmul.mubr.bf16.gmra.mrb[0].mxu0 %v607
      %v1136 = vpop.f32.mrb[0].mxu0
      %v1137 = vadd.f32 %v976, %v1136
      %v1138 = vpop.f32.mrb[0].mxu0
      %v1139 = vpop.f32.mrb[0].mxu0
      %v1140 = vadd.f32 %v979, %v1139
      %v1141 = vpop.f32.mrb[0].mxu0
      %1142 = vmatprep.mubr.bf16.mxu0 %v612
      %1143 = vmatmul.mubr.bf16.gmra.mrb[0].mxu0 %v611
      %v1144 = vpop.f32.mrb[0].mxu0
      %v1145 = vadd.f32 %v984, %v1144
      %v1146 = vpop.f32.mrb[0].mxu0
      %v1147 = vpop.f32.mrb[0].mxu0
      %v1148 = vadd.f32 %v987, %v1147
      %v1149 = vpop.f32.mrb[0].mxu0
      %1150 = vmatprep.mubr.bf16.mxu0 %v616
      %1151 = vmatmul.mubr.bf16.gmra.mrb[0].mxu0 %v615
      %v1152 = vpop.f32.mrb[0].mxu0
      %v1153 = vadd.f32 %v992, %v1152
      %v1154 = vpop.f32.mrb[0].mxu0
      %v1155 = vpop.f32.mrb[0].mxu0
      %v1156 = vadd.f32 %v995, %v1155
      %v1157 = vpop.f32.mrb[0].mxu0
      %1158 = vmatprep.mubr.bf16.mxu0 %v620
      %1159 = vmatmul.mubr.bf16.gmra.mrb[0].mxu0 %v619
      %v1160 = vpop.f32.mrb[0].mxu0
      %v1161 = vadd.f32 %v1000, %v1160
      %v1162 = vpop.f32.mrb[0].mxu0
      %v1163 = vpop.f32.mrb[0].mxu0
      %v1164 = vadd.f32 %v1003, %v1163
      %v1165 = vpop.f32.mrb[0].mxu0
      %1166 = vmatprep.mubr.bf16.mxu0 %v624
      %1167 = vmatmul.mubr.bf16.gmra.mrb[0].mxu0 %v623
      %v1168 = vpop.f32.mrb[0].mxu0
      %v1169 = vadd.f32 %v1008, %v1168
      %v1170 = vpop.f32.mrb[0].mxu0
      %v1171 = vpop.f32.mrb[0].mxu0
      %v1172 = vadd.f32 %v1011, %v1171
      %v1173 = vpop.f32.mrb[0].mxu0
      %1174 = vmatprep.mubr.bf16.mxu0 %v628
      %1175 = vmatmul.mubr.bf16.gmra.mrb[0].mxu0 %v627
      %v1176 = vpop.f32.mrb[0].mxu0
      %v1177 = vadd.f32 %v1016, %v1176
      %v1178 = vpop.f32.mrb[0].mxu0
      %v1179 = vpop.f32.mrb[0].mxu0
      %v1180 = vadd.f32 %v1019, %v1179
      %v1181 = vpop.f32.mrb[0].mxu0
      %1182 = vmatprep.mubr.bf16.mxu0 %v632
      %1183 = vmatmul.mubr.bf16.gmra.mrb[0].mxu0 %v631
      %v1184 = vpop.f32.mrb[0].mxu0
      %v1185 = vadd.f32 %v1024, %v1184
      %v1186 = vpop.f32.mrb[0].mxu0
      %v1187 = vpop.f32.mrb[0].mxu0
      %v1188 = vadd.f32 %v1027, %v1187
      %v1189 = vpop.f32.mrb[0].mxu0
      %1190 = vmatprep.mubr.bf16.mxu0 %v636
      %1191 = vmatmul.mubr.bf16.gmra.mrb[0].mxu0 %v635
      %v1192 = vpop.f32.mrb[0].mxu0
      %v1193 = vadd.f32 %v1032, %v1192
      %v1194 = vpop.f32.mrb[0].mxu0
      %v1195 = vpop.f32.mrb[0].mxu0
      %v1196 = vadd.f32 %v1035, %v1195
      %v1197 = vpop.f32.mrb[0].mxu0
      %1198 = vmatprep.mubr.bf16.mxu0 %v640
      %1199 = vmatmul.mubr.bf16.gmra.mrb[0].mxu0 %v639
      %v1200 = vpop.f32.mrb[0].mxu0
      %v1201 = vadd.f32 %v1040, %v1200
      %v1202 = vpop.f32.mrb[0].mxu0
      %v1203 = vpop.f32.mrb[0].mxu0
      %v1204 = vadd.f32 %v1043, %v1203
      %v1205 = vpop.f32.mrb[0].mxu0
      %1206 = vmatprep.mubr.bf16.mxu0 %v644
      %1207 = vmatmul.mubr.bf16.gmra.mrb[0].mxu0 %v643
      %v1208 = vpop.f32.mrb[0].mxu0
      %v1209 = vadd.f32 %v1048, %v1208
      %v1210 = vpop.f32.mrb[0].mxu0
      %v1211 = vpop.f32.mrb[0].mxu0
      %v1212 = vadd.f32 %v1051, %v1211
      %v1213 = vpop.f32.mrb[0].mxu0
      %1214 = vmatprep.mubr.bf16.mxu0 %v648
      %1215 = vmatmul.mubr.bf16.gmra.mrb[0].mxu0 %v647
      %v1216 = vpop.f32.mrb[0].mxu0
      %v1217 = vadd.f32 %v1056, %v1216
      %v1218 = vpop.f32.mrb[0].mxu0
      %v1219 = vpop.f32.mrb[0].mxu0
      %v1220 = vadd.f32 %v1059, %v1219
      %v1221 = vpop.f32.mrb[0].mxu0
      %1222 = vmatprep.mubr.bf16.mxu0 %v652
      %1223 = vmatmul.mubr.bf16.gmra.mrb[0].mxu0 %v651
      %v1224 = vpop.f32.mrb[0].mxu0
      %v1225 = vadd.f32 %v1064, %v1224
      %v1226 = vpop.f32.mrb[0].mxu0
      %v1227 = vpop.f32.mrb[0].mxu0
      %v1228 = vadd.f32 %v1067, %v1227
      %v1229 = vpop.f32.mrb[0].mxu0
      %1230 = vdwg.mxu0
      %v1231 = vadd.f32 %v237, %v1105
      %v1232 = vadd.f32 %v238, %v1108
      %v1233 = vadd.f32 %v239, %v1113
      %v1234 = vadd.f32 %v240, %v1116
      %v1235 = vadd.f32 %v241, %v1121
      %v1236 = vadd.f32 %v242, %v1124
      %v1237 = vadd.f32 %v243, %v1129
      %v1238 = vadd.f32 %v244, %v1132
      %v1239 = vadd.f32 %v245, %v1137
      %v1240 = vadd.f32 %v246, %v1140
      %v1241 = vadd.f32 %v247, %v1145
      %v1242 = vadd.f32 %v248, %v1148
      %v1243 = vadd.f32 %v249, %v1153
      %v1244 = vadd.f32 %v250, %v1156
      %v1245 = vadd.f32 %v251, %v1161
      %v1246 = vadd.f32 %v252, %v1164
      %v1247 = vadd.f32 %v253, %v1169
      %v1248 = vadd.f32 %v254, %v1172
      %v1249 = vadd.f32 %v255, %v1177
      %v1250 = vadd.f32 %v256, %v1180
      %v1251 = vadd.f32 %v257, %v1185
      %v1252 = vadd.f32 %v258, %v1188
      %v1253 = vadd.f32 %v259, %v1193
      %v1254 = vadd.f32 %v260, %v1196
      %v1255 = vadd.f32 %v261, %v1201
      %v1256 = vadd.f32 %v262, %v1204
      %v1257 = vadd.f32 %v263, %v1209
      %v1258 = vadd.f32 %v264, %v1212
      %v1259 = vadd.f32 %v265, %v1217
      %v1260 = vadd.f32 %v266, %v1220
      %v1261 = vadd.f32 %v267, %v1225
      %v1262 = vadd.f32 %v268, %v1228
      %1263 = vst [vmem:[%s198] sm:$0xff] %v1231
      %1264 = vst [vmem:[%s198 + $0x8] sm:$0xff] %v1232
      %1265 = vst [vmem:[%s198 + $0x10] sm:$0xff] %v1233
      %1266 = vst [vmem:[%s198 + $0x18] sm:$0xff] %v1234
      %1267 = vst [vmem:[%s198 + $0x20] sm:$0xff] %v1235
      %1268 = vst [vmem:[%s198 + $0x28] sm:$0xff] %v1236
      %1269 = vst [vmem:[%s198 + $0x30] sm:$0xff] %v1237
      %1270 = vst [vmem:[%s198 + $0x38] sm:$0xff] %v1238
      %1271 = vst [vmem:[%s198 + $0x40] sm:$0xff] %v1239
      %1272 = vst [vmem:[%s198 + $0x48] sm:$0xff] %v1240
      %1273 = vst [vmem:[%s198 + $0x50] sm:$0xff] %v1241
      %1274 = vst [vmem:[%s198 + $0x58] sm:$0xff] %v1242
      %1275 = vst [vmem:[%s198 + $0x60] sm:$0xff] %v1243
      %1276 = vst [vmem:[%s198 + $0x68] sm:$0xff] %v1244
      %1277 = vst [vmem:[%s198 + $0x70] sm:$0xff] %v1245
      %1278 = vst [vmem:[%s198 + $0x78] sm:$0xff] %v1246
      %1279 = vst [vmem:[%s198 + $0x80] sm:$0xff] %v1247
      %1280 = vst [vmem:[%s198 + $0x88] sm:$0xff] %v1248
      %1281 = vst [vmem:[%s198 + $0x90] sm:$0xff] %v1249
      %1282 = vst [vmem:[%s198 + $0x98] sm:$0xff] %v1250
      %1283 = vst [vmem:[%s198 + $0xa0] sm:$0xff] %v1251
      %1284 = vst [vmem:[%s198 + $0xa8] sm:$0xff] %v1252
      %1285 = vst [vmem:[%s198 + $0xb0] sm:$0xff] %v1253
      %1286 = vst [vmem:[%s198 + $0xb8] sm:$0xff] %v1254
      %1287 = vst [vmem:[%s198 + $0xc0] sm:$0xff] %v1255
      %1288 = vst [vmem:[%s198 + $0xc8] sm:$0xff] %v1256
      %1289 = vst [vmem:[%s198 + $0xd0] sm:$0xff] %v1257
      %1290 = vst [vmem:[%s198 + $0xd8] sm:$0xff] %v1258
      %1291 = vst [vmem:[%s198 + $0xe0] sm:$0xff] %v1259
      %1292 = vst [vmem:[%s198 + $0xe8] sm:$0xff] %v1260
      %1293 = vst [vmem:[%s198 + $0xf0] sm:$0xff] %v1261
      %1294 = vst [vmem:[%s198 + $0xf8] sm:$0xff] %v1262
      %s1295 = smul.u32 32, %s17
      %p1296 = scmp.lt.s32.totalorder %s1295, 63
      %s1297 = scalar_select %p1296, %s1295, 63
      %s1298 = smul.addr %s1297, 8
      %s1299 = scalar_lea.vmem %s2, %s1298
      // Predicated region
      $region33: #{lgcn_encoder_forward.3} parent=27 // pred_check
        %p1300 = pneg %p97
      $region34: #{lgcn_encoder_forward.3} parent=27 // pred_check_branch
        %1302 = sbr.rel (%p1300) target = $region36
      $region35: #{lgcn_encoder_forward.3} parent=27 // pred_region
        %s1303 = smul.u32 32, %s17
      $region36: #{lgcn_encoder_forward.3} parent=27 // pred_fallthru
        _
    $region28: #{lgcn_encoder_forward.3} parent=5 // pred_fallthru
      _
    %p1304 = scmp.le.s32.totalorder 2, %s8
    // Predicated region
    $region37: #{lgcn_encoder_forward.3} parent=5 // pred_check
      %p1305 = pneg %p1304
    $region38: #{lgcn_encoder_forward.3} parent=5 // pred_check_branch
      %1307 = sbr.rel (%p1305) target = $region40
    $region39: #{lgcn_encoder_forward.3} parent=5 // pred_region
      %s1308 = ssub.s32 %s8, 2
      // Predicated region
      $region41: #{lgcn_encoder_forward.3} parent=39 // pred_check
        %p1309 = pneg %p103
      $region42: #{lgcn_encoder_forward.3} parent=39 // pred_check_branch
        %1311 = sbr.rel (%p1309) target = $region44
      $region43: #{lgcn_encoder_forward.3} parent=39 // pred_region
        %s1312 = smul.u32 32, %s19
        %p1313 = scmp.lt.s32.totalorder %s1312, 63
        %s1314 = scalar_select %p1313, %s1312, 63
        %s1315 = smul.addr %s1314, 8
        %s1316 = scalar_lea.vmem %s2, %s1315
      $region44: #{lgcn_encoder_forward.3} parent=39 // pred_fallthru
        _
    $region40: #{lgcn_encoder_forward.3} parent=5 // pred_fallthru
      _
  $region6: #{lgcn_encoder_forward.3} parent=0 // loop_footer
    %s12 = sadd.s32 1, %s8
  $region7: #{lgcn_encoder_forward.3} parent=0 // loop_footer_branch
    %7 = sbr.rel target = $region3
  $region8: #{lgcn_encoder_forward.3} parent=0 // loop_exit
    _

</llo_original>
